<compile_context>
chip_gen: v5e
topology: v5e:2x2
jax: 0.10.0
libtpu: 0.0.40
codegen_flags: <defaults>
</compile_context>

<pallas_src>
import functools

import jax
import jax.numpy as jnp
import numpy as np
from jax.experimental import pallas as pl
from jax.experimental.pallas import tpu as pltpu


def bow_kernel(ids_ref, emb_ref, out_ref):
    """One (batch-tile, seq-chunk) grid step.

    ids_ref : (Lt*Bt, 1) int32   token ids, row index = l*Bt + b
    emb_ref : (V, E)     float32 full embedding table (VMEM resident)
    out_ref : (Bt, E)    float32 running max / final encoding
    """
    s = pl.program_id(1)

    n = ids_ref.shape[0]            # n = Lt * Bt
    v = emb_ref.shape[0]
    bt = out_ref.shape[0]
    lt = n // bt

    # One-hot gather on the MXU:  (n, V) @ (V, E) -> (n, E), f32 accumulate.
    ids = ids_ref[...]                                        # (n, 1)
    vocab = jax.lax.broadcasted_iota(jnp.int32, (n, v), 1)    # (n, V)
    onehot = (ids == vocab).astype(emb_ref.dtype)             # (n, V)
    gathered = jnp.dot(onehot, emb_ref[...],
                       preferred_element_type=jnp.float32)    # (n, E)

    # Rows are l-major (row = l*Bt + b): max-reduce the seq chunk.
    pooled = jnp.max(gathered.reshape(lt, bt, -1), axis=0)    # (Bt, E)

    @pl.when(s == 0)
    def _init():
        out_ref[...] = jnp.full(out_ref.shape, -jnp.inf, out_ref.dtype)

    out_ref[...] = jnp.maximum(out_ref[...], pooled.astype(out_ref.dtype))

    @pl.when(s == pl.num_programs(1) - 1)
    def _finalize():
        out_ref[...] = jnp.tanh(out_ref[...])


@functools.partial(jax.jit, static_argnames=("bt", "lt"))
def bow_encode(ids, emb_table, *, bt=8, lt=None):
    """ids: (B, L) int32, emb_table: (V, E) float32 -> (B, E) float32."""
    B, L = ids.shape
    V, E = emb_table.shape

    if lt is None or L % lt != 0:
        lt = L                                   # single seq chunk
    nb = pl.cdiv(B, bt)
    ns = L // lt
    b_pad = nb * bt

    # Pad batch to a multiple of the tile (padded rows sliced off below) and
    # lay ids out as (nb, L*Bt, 1) with row index = l*Bt + b so each
    # (batch-tile, seq-chunk) block is a contiguous, sublane-aligned slab.
    ids_p = jnp.pad(ids.astype(jnp.int32), ((0, b_pad - B), (0, 0)))
    ids_k = ids_p.reshape(nb, bt, L).transpose(0, 2, 1).reshape(nb, L * bt, 1)

    out = pl.pallas_call(
        bow_kernel,
        out_shape=jax.ShapeDtypeStruct((b_pad, E), emb_table.dtype),
        grid_spec=pltpu.PrefetchScalarGridSpec(
            num_scalar_prefetch=0,
            grid=(nb, ns),
            in_specs=[
                # (Lt*Bt, 1) id slab per step (leading tile dim squeezed).
                pl.BlockSpec((None, lt * bt, 1), lambda i, s: (i, s, 0)),
                # Full table, constant block index -> fetched from HBM once,
                # resident in VMEM across the whole grid.
                pl.BlockSpec((V, E), lambda i, s: (0, 0)),
            ],
            # Output block fixed across the seq axis -> it is the max
            # accumulator; no extra VMEM scratch needed.
            out_specs=pl.BlockSpec((bt, E), lambda i, s: (i, 0)),
        ),
        compiler_params=pltpu.CompilerParams(
            dimension_semantics=("parallel", "arbitrary"),
            vmem_limit_bytes=48 * 1024 * 1024,
        ),
    )(ids_k, emb_table)
    return out[:B]


if __name__ == "__main__":
    # Small, deterministic setup consistent with the module's forward.
    vocab_size = 64
    emb_size = 128
    batch = 2
    seq_len = 8

    key = jax.random.PRNGKey(0)
    k_emb, k_ids = jax.random.split(key)

    # Deterministic "parameter" init (nn.Embedding default is N(0, 1)).
    emb_table = jax.random.normal(k_emb, (vocab_size, emb_size), dtype=jnp.float32)
    ids = jax.random.randint(k_ids, (batch, seq_len), 0, vocab_size, dtype=jnp.int32)

    out = bow_encode(ids, emb_table)
    out = jax.block_until_ready(out)

    # Reference (pure JAX) check of the eval-mode forward pass.
    ref = jnp.tanh(jnp.max(emb_table[ids], axis=1))
    np.testing.assert_allclose(np.asarray(out), np.asarray(ref), rtol=1e-5, atol=1e-5)

    print("KERNEL_OK")
</pallas_src>

<mosaic_0001>
module attributes {stable_mosaic.version = 11 : i64} {
  func.func @bow_kernel(%arg0: i32, %arg1: i32, %arg2: memref<1x64x1xi32, #tpu.memory_space<vmem>>, %arg3: memref<64x128xf32, #tpu.memory_space<vmem>>, %arg4: memref<8x128xf32, #tpu.memory_space<vmem>>) attributes {dimension_semantics = [#tpu.dimension_semantics<parallel>, #tpu.dimension_semantics<arbitrary>], iteration_bounds = array<i64: 1, 1>, scalar_prefetch = 0 : i64, scratch_operands = 0 : i64, tpu.core_type = #tpu.core_type<tc>, window_params = [{transform_indices = @transform_0, window_bounds = array<i64: 1, 64, 1>}, {pipeline_mode = #tpu.pipeline_mode<synchronous>, transform_indices = @transform_1, window_bounds = array<i64: 64, 128>}, {transform_indices = @transform_2, window_bounds = array<i64: 8, 128>}]} {
    %c0 = arith.constant 0 : index
    %c0_0 = arith.constant 0 : index
    %c0_1 = arith.constant 0 : index
    %0 = vector.load %arg2[%c0, %c0_0, %c0_1] : memref<1x64x1xi32, #tpu.memory_space<vmem>>, vector<1x64x1xi32>
    %1 = vector.shape_cast %0 : vector<1x64x1xi32> to vector<64x1xi32>
    %2 = tpu.iota {dimensions = array<i32: 1>} : vector<64x64xi32>
    %3 = vector.broadcast %1 : vector<64x1xi32> to vector<64x64xi32>
    %4 = arith.cmpi eq, %3, %2 : vector<64x64xi32>
    %5 = arith.extui %4 : vector<64x64xi1> to vector<64x64xi32>
    %6 = arith.sitofp %5 : vector<64x64xi32> to vector<64x64xf32>
    %c0_2 = arith.constant 0 : index
    %c0_3 = arith.constant 0 : index
    %7 = vector.load %arg3[%c0_2, %c0_3] : memref<64x128xf32, #tpu.memory_space<vmem>>, vector<64x128xf32>
    %cst = arith.constant dense<0.000000e+00> : vector<64x128xf32>
    %8 = tpu.matmul %6, %7, %cst {dimension_numbers = #tpu.dot_dimension_numbers<[1], [0], [0], [1], [0, 0, 1, 1], [], []>} : vector<64x64xf32>, vector<64x128xf32>, vector<64x128xf32> -> vector<64x128xf32>
    %9 = vector.shape_cast %8 : vector<64x128xf32> to vector<8x8x128xf32>
    %cst_4 = arith.constant dense<0xFF800000> : vector<8x128xf32>
    %10 = vector.multi_reduction <maximumf>, %9, %cst_4 [0] : vector<8x8x128xf32> to vector<8x128xf32>
    %c0_i32 = arith.constant 0 : i32
    %11 = arith.cmpi eq, %arg1, %c0_i32 : i32
    %12 = arith.extui %11 : i1 to i32
    %c0_i32_5 = arith.constant 0 : i32
    %13 = arith.cmpi ne, %12, %c0_i32_5 : i32
    scf.if %13 {
      %cst_12 = arith.constant 0xFF800000 : f32
      %20 = vector.broadcast %cst_12 : f32 to vector<8x128xf32>
      %c0_13 = arith.constant 0 : index
      %c0_14 = arith.constant 0 : index
      %21 = vector.load %arg4[%c0_13, %c0_14] : memref<8x128xf32, #tpu.memory_space<vmem>>, vector<8x128xf32>
      tpu.vector_store %arg4[%c0_13, %c0_14], %20 {strides = array<i32>} : memref<8x128xf32, #tpu.memory_space<vmem>>, vector<8x128xf32>,
    } else {
    }
    %c0_6 = arith.constant 0 : index
    %c0_7 = arith.constant 0 : index
    %14 = vector.load %arg4[%c0_6, %c0_7] : memref<8x128xf32, #tpu.memory_space<vmem>>, vector<8x128xf32>
    %15 = arith.maximumf %14, %10 : vector<8x128xf32>
    %c0_8 = arith.constant 0 : index
    %c0_9 = arith.constant 0 : index
    %16 = vector.load %arg4[%c0_8, %c0_9] : memref<8x128xf32, #tpu.memory_space<vmem>>, vector<8x128xf32>
    tpu.vector_store %arg4[%c0_8, %c0_9], %15 {strides = array<i32>} : memref<8x128xf32, #tpu.memory_space<vmem>>, vector<8x128xf32>,
    %c0_i32_10 = arith.constant 0 : i32
    %17 = arith.cmpi eq, %arg1, %c0_i32_10 : i32
    %18 = arith.extui %17 : i1 to i32
    %c0_i32_11 = arith.constant 0 : i32
    %19 = arith.cmpi ne, %18, %c0_i32_11 : i32
    scf.if %19 {
      %c0_12 = arith.constant 0 : index
      %c0_13 = arith.constant 0 : index
      %20 = vector.load %arg4[%c0_12, %c0_13] : memref<8x128xf32, #tpu.memory_space<vmem>>, vector<8x128xf32>
      %21 = math.tanh %20 : vector<8x128xf32>
      %c0_14 = arith.constant 0 : index
      %c0_15 = arith.constant 0 : index
      %22 = vector.load %arg4[%c0_14, %c0_15] : memref<8x128xf32, #tpu.memory_space<vmem>>, vector<8x128xf32>
      tpu.vector_store %arg4[%c0_14, %c0_15], %21 {strides = array<i32>} : memref<8x128xf32, #tpu.memory_space<vmem>>, vector<8x128xf32>,
    } else {
    }
    return
  }
  func.func @transform_0(%arg0: i32, %arg1: i32) -> (i32, i32, i32) {
    %c0_i32 = arith.constant 0 : i32
    %c0_i32_0 = arith.constant 0 : i32
    return %arg0, %arg1, %c0_i32 : i32, i32, i32
  }
  func.func @transform_1(%arg0: i32, %arg1: i32) -> (i32, i32) {
    %c0_i32 = arith.constant 0 : i32
    %c0_i32_0 = arith.constant 0 : i32
    %c0_i32_1 = arith.constant 0 : i32
    return %c0_i32, %c0_i32_0 : i32, i32
  }
  func.func @transform_2(%arg0: i32, %arg1: i32) -> (i32, i32) {
    %c0_i32 = arith.constant 0 : i32
    %c0_i32_0 = arith.constant 0 : i32
    return %arg0, %c0_i32 : i32, i32
  }
}

</mosaic_0001>

<llo_original>
// kernel: bow_encode.1
$region0: #{bow_encode.1}
  #allocation0 [shape = 'u32[]', space=smem, size = 0x4, offset = 0x4, fixed_abs, tag = 'smem constant byte address 0x4 - core index']
  #allocation1 [shape = 'u32[72,128]{1,0:T(1,128)}', space=vmem, size = 0x9000, scoped, tag = 'internal scratch']
  %s0 = inlined_call_operand.vmem [shape: s32[1,64,1], index: 0, kind: input, shape index: {}]
  %s1 = inlined_call_operand.vmem [shape: f32[64,128], index: 1, kind: input, shape index: {}]
  %s2 = inlined_call_operand.vmem [shape: f32[8,128], index: 2, kind: output, shape index: {}]
  %s3 = sld [smem:[#allocation0]]
  $region26: #{bow_encode.1} parent=0
    _
  %s5 = ssub.s32 1, %s3
  %s6 = scalar_select 0, %s5, %s3
  // Predicated region
  $region2: #{bow_encode.1} parent=0 // pred_check
    _
  $region3: #{bow_encode.1} parent=0 // pred_check_branch
    %8 = sbr.rel (0) target = $region5
  $region4: #{bow_encode.1} parent=0 // pred_region
    _
  $region5: #{bow_encode.1} parent=0 // pred_fallthru
    _
  // Predicated region
  $region6: #{bow_encode.1} parent=0 // pred_check
    _
  $region7: #{bow_encode.1} parent=0 // pred_check_branch
    %10 = sbr.rel (0) target = $region9
  $region8: #{bow_encode.1} parent=0 // pred_region
    _
  $region9: #{bow_encode.1} parent=0 // pred_fallthru
    _
  %v11 = vld [vmem:[%s0] sm:$0xff]
  %v12 = vld [vmem:[%s0 + $0x8] sm:$0xff]
  %v13 = vld [vmem:[%s0 + $0x10] sm:$0xff]
  %v14 = vld [vmem:[%s0 + $0x18] sm:$0xff]
  %v15 = vld [vmem:[%s0 + $0x20] sm:$0xff]
  %v16 = vld [vmem:[%s0 + $0x28] sm:$0xff]
  %v17 = vld [vmem:[%s0 + $0x30] sm:$0xff]
  %v18 = vld [vmem:[%s0 + $0x38] sm:$0xff]
  %v19 = vlaneseq
  %v20 = vand.u32 %v19, 127
  %21 = vset.pattern.permute.xlu0 0
  %22 = vperm.xlu0 %21, %v11
  %v23 = vpop.permute.xlu0 %22
  %24 = vset.pattern.permute.xlu0 0
  %25 = vperm.xlu0 %24, %v12
  %v26 = vpop.permute.xlu0 %25
  %27 = vset.pattern.permute.xlu0 0
  %28 = vperm.xlu0 %27, %v13
  %v29 = vpop.permute.xlu0 %28
  %30 = vset.pattern.permute.xlu0 0
  %31 = vperm.xlu0 %30, %v14
  %v32 = vpop.permute.xlu0 %31
  %33 = vset.pattern.permute.xlu0 0
  %34 = vperm.xlu0 %33, %v15
  %v35 = vpop.permute.xlu0 %34
  %36 = vset.pattern.permute.xlu0 0
  %37 = vperm.xlu0 %36, %v16
  %v38 = vpop.permute.xlu0 %37
  %39 = vset.pattern.permute.xlu0 0
  %40 = vperm.xlu0 %39, %v17
  %v41 = vpop.permute.xlu0 %40
  %42 = vset.pattern.permute.xlu0 0
  %43 = vperm.xlu0 %42, %v18
  %v44 = vpop.permute.xlu0 %43
  %vm45 = vcmp.eq.s32.totalorder %v23, %v20
  %vm46 = vcmp.eq.s32.totalorder %v26, %v20
  %vm47 = vcmp.eq.s32.totalorder %v29, %v20
  %vm48 = vcmp.eq.s32.totalorder %v32, %v20
  %vm49 = vcmp.eq.s32.totalorder %v35, %v20
  %vm50 = vcmp.eq.s32.totalorder %v38, %v20
  %vm51 = vcmp.eq.s32.totalorder %v41, %v20
  %vm52 = vcmp.eq.s32.totalorder %v44, %v20
  %v53 = vsel %vm45, 1, 0
  %v54 = vsel %vm46, 1, 0
  %v55 = vsel %vm47, 1, 0
  %v56 = vsel %vm48, 1, 0
  %v57 = vsel %vm49, 1, 0
  %v58 = vsel %vm50, 1, 0
  %v59 = vsel %vm51, 1, 0
  %v60 = vsel %vm52, 1, 0
  %v61 = vcvt.s32.f32 %v53
  %v62 = vcvt.s32.f32 %v54
  %v63 = vcvt.s32.f32 %v55
  %v64 = vcvt.s32.f32 %v56
  %v65 = vcvt.s32.f32 %v57
  %v66 = vcvt.s32.f32 %v58
  %v67 = vcvt.s32.f32 %v59
  %v68 = vcvt.s32.f32 %v60
  %v69 = vld [vmem:[%s1] sm:$0xff]
  %v70 = vld [vmem:[%s1 + $0x8] sm:$0xff]
  %v71 = vld [vmem:[%s1 + $0x10] sm:$0xff]
  %v72 = vld [vmem:[%s1 + $0x18] sm:$0xff]
  %v73 = vld [vmem:[%s1 + $0x20] sm:$0xff]
  %v74 = vld [vmem:[%s1 + $0x28] sm:$0xff]
  %v75 = vld [vmem:[%s1 + $0x30] sm:$0xff]
  %v76 = vld [vmem:[%s1 + $0x38] sm:$0xff]
  %vm77 = vcmask 523264
  %v79 = vsel %vm77, %v61, 0
  %v82 = vsel %vm77, %v62, 0
  %v85 = vsel %vm77, %v63, 0
  %v88 = vsel %vm77, %v64, 0
  %v91 = vsel %vm77, %v65, 0
  %v94 = vsel %vm77, %v66, 0
  %v97 = vsel %vm77, %v67, 0
  %v100 = vsel %vm77, %v68, 0
  %102 = vmatpush.msra.mxu0 0.0
  %103 = vmatpush.msra.mxu0 0.0
  %104 = vmatpush.msra.mxu0 0.0
  %105 = vmatpush.msra.mxu0 0.0
  %106 = vmatpush.msra.mxu0 0.0
  %107 = vmatpush.msra.mxu0 0.0
  %108 = vmatpush.msra.mxu0 0.0
  %109 = vmatpush.msra.mxu0 0.0
  %110 = vmatpush.msra.mxu0 %v76
  %111 = vmatpush.msra.mxu0 %v75
  %112 = vmatpush.msra.mxu0 %v74
  %113 = vmatpush.msra.mxu0 %v73
  %114 = vmatpush.msra.mxu0 %v72
  %115 = vmatpush.msra.mxu0 %v71
  %116 = vmatpush.msra.mxu0 %v70
  %117 = vmatpush.msra.mxu0 %v69
  %118 = vmatmul.f32.gmra.mxu0 %v79
  %v119 = vpop.f32.mrf.mxu0
  %v120 = vadd.f32 0.0, %v119
  %121 = vmatmul.f32.gmra.mxu0 %v82
  %v122 = vpop.f32.mrf.mxu0
  %v123 = vadd.f32 0.0, %v122
  %124 = vmatmul.f32.gmra.mxu0 %v85
  %v125 = vpop.f32.mrf.mxu0
  %v126 = vadd.f32 0.0, %v125
  %127 = vmatmul.f32.gmra.mxu0 %v88
  %v128 = vpop.f32.mrf.mxu0
  %v129 = vadd.f32 0.0, %v128
  %130 = vmatmul.f32.gmra.mxu0 %v91
  %v131 = vpop.f32.mrf.mxu0
  %v132 = vadd.f32 0.0, %v131
  %133 = vmatmul.f32.gmra.mxu0 %v94
  %v134 = vpop.f32.mrf.mxu0
  %v135 = vadd.f32 0.0, %v134
  %136 = vmatmul.f32.gmra.mxu0 %v97
  %v137 = vpop.f32.mrf.mxu0
  %v138 = vadd.f32 0.0, %v137
  %139 = vmatmul.f32.gmra.mxu0 %v100
  %v140 = vpop.f32.mrf.mxu0
  %v141 = vadd.f32 0.0, %v140
  %142 = vdwg.mxu0
  %v143 = vmax.f32 %v120, %v132
  %v144 = vmax.f32 %v123, %v135
  %v145 = vmax.f32 %v126, %v138
  %v146 = vmax.f32 %v129, %v141
  %v147 = vmax.f32 %v143, %v144
  %v148 = vmax.f32 %v145, %v146
  %v149 = vmax.f32 %v147, %v148
  %p150 = scmp.eq.s32.totalorder 0, 0
  // Predicated region
  $region10: #{bow_encode.1} parent=0 // pred_check
    %p151 = pneg %p150
  $region11: #{bow_encode.1} parent=0 // pred_check_branch
    %153 = sbr.rel (%p151) target = $region13
  $region12: #{bow_encode.1} parent=0 // pred_region
    %154 = vst [vmem:[%s2] sm:$0xff] -inf
  $region13: #{bow_encode.1} parent=0 // pred_fallthru
    _
  %v155 = vld [vmem:[%s2] sm:$0xff]
  %v156 = vmax.f32 %v155, %v149
  %157 = vst [vmem:[%s2] sm:$0xff] %v156
  // Predicated region
  $region14: #{bow_encode.1} parent=0 // pred_check
    %p158 = pneg %p150
  $region15: #{bow_encode.1} parent=0 // pred_check_branch
    %160 = sbr.rel (%p158) target = $region17
  $region16: #{bow_encode.1} parent=0 // pred_region
    %v161 = vld [vmem:[%s2] sm:$0xff]
    %v162 = vtanh.pop %v161
    %163 = vst [vmem:[%s2] sm:$0xff] %v162
  $region17: #{bow_encode.1} parent=0 // pred_fallthru
    _
  // Predicated region
  $region18: #{bow_encode.1} parent=0 // pred_check
    _
  $region19: #{bow_encode.1} parent=0 // pred_check_branch
    %165 = sbr.rel (0) target = $region21
  $region20: #{bow_encode.1} parent=0 // pred_region
    _
  $region21: #{bow_encode.1} parent=0 // pred_fallthru
    _
  // Predicated region
  $region22: #{bow_encode.1} parent=0 // pred_check
    _
  $region23: #{bow_encode.1} parent=0 // pred_check_branch
    %167 = sbr.rel (0) target = $region25
  $region24: #{bow_encode.1} parent=0 // pred_region
    _
  $region25: #{bow_encode.1} parent=0 // pred_fallthru
    _

</llo_original>
